<compile_context>
chip_gen: v7x
topology: tpu7x:2x2x1
jax: 0.10.0
libtpu: 0.0.40
codegen_flags: <defaults>
</compile_context>

<pallas_src>
import jax
import jax.numpy as jnp
from jax.experimental import pallas as pl
from jax.experimental.pallas import tpu as pltpu

EPS = 1e-5  # PyTorch BatchNorm1d default eps


def prebn_linear_kernel(x_ref, gamma_ref, beta_ref, w_ref, b_ref, o_ref, acc_ref):
    """Grid axis 0 walks feature (F) tiles; acc_ref accumulates (B, C_pad) f32."""
    k = pl.program_id(0)

    @pl.when(k == 0)
    def _():
        acc_ref[...] = jnp.zeros_like(acc_ref)

    x_in = x_ref[...]                                   # (B, tF), native dtype
    xf = x_in.astype(jnp.float32)
    inv_b = jnp.float32(1.0 / x_in.shape[0])

    # Single-pass batch statistics over this feature tile (biased variance,
    # matching PyTorch's normalization path).  Keep everything in f32.
    mean = jnp.sum(xf, axis=0, keepdims=True) * inv_b            # (1, tF)
    ex2 = jnp.sum(xf * xf, axis=0, keepdims=True) * inv_b        # (1, tF)
    var = ex2 - mean * mean
    s = gamma_ref[...].astype(jnp.float32) * jax.lax.rsqrt(var + EPS)  # (1, tF)

    # Fold BN into the Linear slice for this tile:
    #   xn_tile @ w_tile = x_tile @ (s^T * w_tile) + (beta - mean*s) @ w_tile
    w = w_ref[...].astype(jnp.float32)                           # (tF, C_pad)
    w_fold = w * s.T                                             # scale rows by s
    shift = beta_ref[...].astype(jnp.float32) - mean * s         # (1, tF)

    # Feed the MXU in x's native dtype when it is sub-f32 (halves HBM bytes /
    # doubles MXU throughput for bf16 featurizer outputs); f32 path unchanged.
    if x_in.dtype == jnp.float32:
        lhs, rhs = xf, w_fold
    else:
        lhs, rhs = x_in, w_fold.astype(x_in.dtype)

    acc_ref[...] += (
        jnp.dot(lhs, rhs, preferred_element_type=jnp.float32)
        + jnp.dot(shift, w, preferred_element_type=jnp.float32)  # (1, C_pad) bcast
    )

    @pl.when(k == pl.num_programs(0) - 1)
    def _():
        o_ref[...] = (acc_ref[...] + b_ref[...].astype(jnp.float32)).astype(o_ref.dtype)


def _round_up(v, m):
    return ((v + m - 1) // m) * m


def _pad2(a, rows, cols):
    pr, pc = rows - a.shape[0], cols - a.shape[1]
    if pr == 0 and pc == 0:
        return a
    return jnp.pad(a, ((0, pr), (0, pc)))  # zero padding keeps padded cols inert


def prebn_forward(x, gamma, beta, w, b, *, tile_f=512):
    """x: (B, F); gamma/beta: (1, F); w: (F, C); b: (1, C).  Returns (B, C)."""
    B, F = x.shape
    C = w.shape[1]

    # Lane-dense output: pad the class dimension to a multiple of 128.
    C_pad = _round_up(C, 128)

    # Feature-tile size: large multiple of 128 (or the whole padded F if small).
    if F <= tile_f:
        tF = _round_up(F, 128)
        F_pad = tF
    else:
        tF = tile_f
        F_pad = _round_up(F, tF)
    num_k = F_pad // tF

    x_p = _pad2(x, B, F_pad)
    g_p = _pad2(gamma, 1, F_pad)
    be_p = _pad2(beta, 1, F_pad)
    w_p = _pad2(w, F_pad, C_pad)   # zero rows for padded features -> no effect
    b_p = _pad2(b, 1, C_pad)

    # Scoped-VMEM budget: double-buffered x/W/gamma/beta/bias tiles + resident
    # output + f32 accumulator, plus headroom.  Capped at 64 MiB (v7x-safe).
    itemsize = x.dtype.itemsize
    vmem_bytes = int(
        2 * (B * tF * itemsize + tF * C_pad * w.dtype.itemsize + 2 * tF * 4 + C_pad * 4)
        + B * C_pad * (4 + itemsize)
        + (8 << 20)
    )
    vmem_bytes = min(max(vmem_bytes, 16 << 20), 64 << 20)

    out = pl.pallas_call(
        prebn_linear_kernel,
        out_shape=jax.ShapeDtypeStruct((B, C_pad), x.dtype),
        grid_spec=pltpu.PrefetchScalarGridSpec(
            num_scalar_prefetch=0,
            grid=(num_k,),                                   # reduction axis (last)
            in_specs=[
                pl.BlockSpec((B, tF), lambda k: (0, k)),     # x tile
                pl.BlockSpec((1, tF), lambda k: (0, k)),     # gamma tile
                pl.BlockSpec((1, tF), lambda k: (0, k)),     # beta tile
                pl.BlockSpec((tF, C_pad), lambda k: (k, 0)), # W tile
                pl.BlockSpec((1, C_pad), lambda k: (0, 0)),  # bias (resident)
            ],
            out_specs=pl.BlockSpec((B, C_pad), lambda k: (0, 0)),  # resident output
            scratch_shapes=[pltpu.VMEM((B, C_pad), jnp.float32)],  # f32 accumulator
        ),
        compiler_params=pltpu.CompilerParams(
            dimension_semantics=("arbitrary",),
            vmem_limit_bytes=vmem_bytes,
        ),
    )(x_p, g_p, be_p, w_p, b_p)

    return out[:, :C]


def prebn_reference(x, gamma, beta, w, b):
    mean = jnp.mean(x, axis=0, keepdims=True)
    var = jnp.mean((x - mean) ** 2, axis=0, keepdims=True)
    xn = (x - mean) * jax.lax.rsqrt(var + EPS)
    xn = xn * gamma + beta
    return xn @ w + b


if __name__ == "__main__":
    key = jax.random.PRNGKey(0)
    k_x, k_g, k_b, k_w, k_lb = jax.random.split(key, 5)

    # Small shapes; tile_f=128 so the F-tiled accumulation path (3 grid steps)
    # is actually exercised.  Realistic tuning shapes are B>=64, F=2048, C~128.
    batch, num_features, num_classes = 8, 384, 16

    x = jax.random.normal(k_x, (batch, num_features), dtype=jnp.float32)

    gamma = 1.0 + 0.1 * jax.random.normal(k_g, (1, num_features), jnp.float32)
    beta = 0.1 * jax.random.normal(k_b, (1, num_features), jnp.float32)
    w = jax.random.normal(k_w, (num_features, num_classes), jnp.float32) * 0.05
    b = 0.01 * jax.random.normal(k_lb, (1, num_classes), jnp.float32)

    out = prebn_forward(x, gamma, beta, w, b, tile_f=128)
    out = jax.block_until_ready(out)

    ref = prebn_reference(x, gamma, beta, w, b)
    assert out.shape == (batch, num_classes)
    assert jnp.allclose(out, ref, atol=1e-4, rtol=1e-4), "mismatch vs reference"

    print("KERNEL_OK")
</pallas_src>

<mosaic_0001>
module attributes {stable_mosaic.version = 11 : i64} {
  func.func @prebn_linear_kernel(%arg0: i32, %arg1: memref<8x128xf32, #tpu.memory_space<vmem>>, %arg2: memref<1x128xf32, #tpu.memory_space<vmem>>, %arg3: memref<1x128xf32, #tpu.memory_space<vmem>>, %arg4: memref<128x128xf32, #tpu.memory_space<vmem>>, %arg5: memref<1x128xf32, #tpu.memory_space<vmem>>, %arg6: memref<8x128xf32, #tpu.memory_space<vmem>>, %arg7: memref<8x128xf32, #tpu.memory_space<vmem>>) attributes {dimension_semantics = [#tpu.dimension_semantics<arbitrary>], iteration_bounds = array<i64: 3>, scalar_prefetch = 0 : i64, scratch_operands = 1 : i64, tpu.core_type = #tpu.core_type<tc>, window_params = [{transform_indices = @transform_0, window_bounds = array<i64: 8, 128>}, {transform_indices = @transform_1, window_bounds = array<i64: 1, 128>}, {transform_indices = @transform_2, window_bounds = array<i64: 1, 128>}, {transform_indices = @transform_3, window_bounds = array<i64: 128, 128>}, {pipeline_mode = #tpu.pipeline_mode<synchronous>, transform_indices = @transform_4, window_bounds = array<i64: 1, 128>}, {pipeline_mode = #tpu.pipeline_mode<synchronous>, transform_indices = @transform_5, window_bounds = array<i64: 8, 128>}]} {
    %c0_i32 = arith.constant 0 : i32
    %0 = arith.cmpi eq, %arg0, %c0_i32 : i32
    %1 = arith.extui %0 : i1 to i32
    %c0_i32_0 = arith.constant 0 : i32
    %2 = arith.cmpi ne, %1, %c0_i32_0 : i32
    scf.if %2 {
      %cst_19 = arith.constant 0.000000e+00 : f32
      %37 = vector.broadcast %cst_19 : f32 to vector<8x128xf32>
      %c0_20 = arith.constant 0 : index
      %c0_21 = arith.constant 0 : index
      %38 = vector.load %arg7[%c0_20, %c0_21] : memref<8x128xf32, #tpu.memory_space<vmem>>, vector<8x128xf32>
      tpu.vector_store %arg7[%c0_20, %c0_21], %37 {strides = array<i32>} : memref<8x128xf32, #tpu.memory_space<vmem>>, vector<8x128xf32>,
    } else {
    }
    %c0 = arith.constant 0 : index
    %c0_1 = arith.constant 0 : index
    %3 = vector.load %arg1[%c0, %c0_1] : memref<8x128xf32, #tpu.memory_space<vmem>>, vector<8x128xf32>
    %cst = arith.constant dense<0.000000e+00> : vector<128xf32>
    %4 = vector.multi_reduction <add>, %3, %cst [0] : vector<8x128xf32> to vector<128xf32>
    %5 = vector.shape_cast %4 : vector<128xf32> to vector<1x128xf32>
    %cst_2 = arith.constant 1.250000e-01 : f32
    %6 = vector.broadcast %cst_2 : f32 to vector<1x128xf32>
    %7 = arith.mulf %5, %6 : vector<1x128xf32>
    %8 = arith.mulf %3, %3 : vector<8x128xf32>
    %cst_3 = arith.constant dense<0.000000e+00> : vector<128xf32>
    %9 = vector.multi_reduction <add>, %8, %cst_3 [0] : vector<8x128xf32> to vector<128xf32>
    %10 = vector.shape_cast %9 : vector<128xf32> to vector<1x128xf32>
    %cst_4 = arith.constant 1.250000e-01 : f32
    %11 = vector.broadcast %cst_4 : f32 to vector<1x128xf32>
    %12 = arith.mulf %10, %11 : vector<1x128xf32>
    %13 = arith.mulf %7, %7 : vector<1x128xf32>
    %14 = arith.subf %12, %13 : vector<1x128xf32>
    %c0_5 = arith.constant 0 : index
    %c0_6 = arith.constant 0 : index
    %15 = vector.load %arg2[%c0_5, %c0_6] : memref<1x128xf32, #tpu.memory_space<vmem>>, vector<1x128xf32>
    %cst_7 = arith.constant 9.99999974E-6 : f32
    %16 = vector.broadcast %cst_7 : f32 to vector<1x128xf32>
    %17 = arith.addf %14, %16 : vector<1x128xf32>
    %18 = math.rsqrt %17 : vector<1x128xf32>
    %19 = arith.mulf %15, %18 : vector<1x128xf32>
    %c0_8 = arith.constant 0 : index
    %c0_9 = arith.constant 0 : index
    %20 = vector.load %arg4[%c0_8, %c0_9] : memref<128x128xf32, #tpu.memory_space<vmem>>, vector<128x128xf32>
    %21 = tpu.transpose %19, [1, 0] : vector<1x128xf32> -> vector<128x1xf32>
    %22 = vector.broadcast %21 : vector<128x1xf32> to vector<128x128xf32>
    %23 = arith.mulf %20, %22 : vector<128x128xf32>
    %c0_10 = arith.constant 0 : index
    %c0_11 = arith.constant 0 : index
    %24 = vector.load %arg3[%c0_10, %c0_11] : memref<1x128xf32, #tpu.memory_space<vmem>>, vector<1x128xf32>
    %25 = arith.mulf %7, %19 : vector<1x128xf32>
    %26 = arith.subf %24, %25 : vector<1x128xf32>
    %c0_12 = arith.constant 0 : index
    %c0_13 = arith.constant 0 : index
    %27 = vector.load %arg7[%c0_12, %c0_13] : memref<8x128xf32, #tpu.memory_space<vmem>>, vector<8x128xf32>
    %cst_14 = arith.constant dense<0.000000e+00> : vector<8x128xf32>
    %28 = tpu.matmul %3, %23, %cst_14 {dimension_numbers = #tpu.dot_dimension_numbers<[1], [0], [0], [1], [0, 0, 1, 1], [], []>} : vector<8x128xf32>, vector<128x128xf32>, vector<8x128xf32> -> vector<8x128xf32>
    %cst_15 = arith.constant dense<0.000000e+00> : vector<1x128xf32>
    %29 = tpu.matmul %26, %20, %cst_15 {dimension_numbers = #tpu.dot_dimension_numbers<[1], [0], [0], [1], [0, 0, 1, 1], [], []>} : vector<1x128xf32>, vector<128x128xf32>, vector<1x128xf32> -> vector<1x128xf32>
    %30 = vector.broadcast %29 : vector<1x128xf32> to vector<8x128xf32>
    %31 = arith.addf %28, %30 : vector<8x128xf32>
    %32 = arith.addf %27, %31 : vector<8x128xf32>
    %c0_16 = arith.constant 0 : index
    %c0_17 = arith.constant 0 : index
    %33 = vector.load %arg7[%c0_16, %c0_17] : memref<8x128xf32, #tpu.memory_space<vmem>>, vector<8x128xf32>
    tpu.vector_store %arg7[%c0_16, %c0_17], %32 {strides = array<i32>} : memref<8x128xf32, #tpu.memory_space<vmem>>, vector<8x128xf32>,
    %c2_i32 = arith.constant 2 : i32
    %34 = arith.cmpi eq, %arg0, %c2_i32 : i32
    %35 = arith.extui %34 : i1 to i32
    %c0_i32_18 = arith.constant 0 : i32
    %36 = arith.cmpi ne, %35, %c0_i32_18 : i32
    scf.if %36 {
      %c0_19 = arith.constant 0 : index
      %c0_20 = arith.constant 0 : index
      %37 = vector.load %arg7[%c0_19, %c0_20] : memref<8x128xf32, #tpu.memory_space<vmem>>, vector<8x128xf32>
      %c0_21 = arith.constant 0 : index
      %c0_22 = arith.constant 0 : index
      %38 = vector.load %arg5[%c0_21, %c0_22] : memref<1x128xf32, #tpu.memory_space<vmem>>, vector<1x128xf32>
      %39 = vector.broadcast %38 : vector<1x128xf32> to vector<8x128xf32>
      %40 = arith.addf %37, %39 : vector<8x128xf32>
      %c0_23 = arith.constant 0 : index
      %c0_24 = arith.constant 0 : index
      %41 = vector.load %arg6[%c0_23, %c0_24] : memref<8x128xf32, #tpu.memory_space<vmem>>, vector<8x128xf32>
      tpu.vector_store %arg6[%c0_23, %c0_24], %40 {strides = array<i32>} : memref<8x128xf32, #tpu.memory_space<vmem>>, vector<8x128xf32>,
    } else {
    }
    return
  }
  func.func @transform_0(%arg0: i32) -> (i32, i32) {
    %c0_i32 = arith.constant 0 : i32
    %c0_i32_0 = arith.constant 0 : i32
    return %c0_i32, %arg0 : i32, i32
  }
  func.func @transform_1(%arg0: i32) -> (i32, i32) {
    %c0_i32 = arith.constant 0 : i32
    %c0_i32_0 = arith.constant 0 : i32
    return %c0_i32, %arg0 : i32, i32
  }
  func.func @transform_2(%arg0: i32) -> (i32, i32) {
    %c0_i32 = arith.constant 0 : i32
    %c0_i32_0 = arith.constant 0 : i32
    return %c0_i32, %arg0 : i32, i32
  }
  func.func @transform_3(%arg0: i32) -> (i32, i32) {
    %c0_i32 = arith.constant 0 : i32
    %c0_i32_0 = arith.constant 0 : i32
    return %arg0, %c0_i32 : i32, i32
  }
  func.func @transform_4(%arg0: i32) -> (i32, i32) {
    %c0_i32 = arith.constant 0 : i32
    %c0_i32_0 = arith.constant 0 : i32
    %c0_i32_1 = arith.constant 0 : i32
    return %c0_i32, %c0_i32_0 : i32, i32
  }
  func.func @transform_5(%arg0: i32) -> (i32, i32) {
    %c0_i32 = arith.constant 0 : i32
    %c0_i32_0 = arith.constant 0 : i32
    %c0_i32_1 = arith.constant 0 : i32
    return %c0_i32, %c0_i32_0 : i32, i32
  }
}

</mosaic_0001>

<llo_original>
// kernel: tpu_custom_call.1
$region0: #{tpu_custom_call.1}
  #allocation0 [shape = 'u32[]', space=smem, size = 0x4, offset = 0x4, fixed_abs, tag = 'smem constant byte address 0x4 - core index']
  #allocation1 [shape = 'u32[144,128]{1,0:T(1,128)}', space=vmem, size = 0x12000, scoped, tag = 'internal scratch']
  #allocation2 [shape = 'f32[8,128]{1,0:T(8,128)}', space=vmem, size = 0x1000, scoped, tag = 'scratch operand']
  %s0 = inlined_call_operand.hbm [shape: f32[8,384], index: 0, kind: input, shape index: {}]
  %s1 = inlined_call_operand.vmem [shape: f32[1,384], index: 1, kind: input, shape index: {}]
  %s2 = inlined_call_operand.vmem [shape: f32[1,384], index: 2, kind: input, shape index: {}]
  %s3 = inlined_call_operand.hbm [shape: f32[384,128], index: 3, kind: input, shape index: {}]
  %s4 = inlined_call_operand.vmem [shape: f32[1,128], index: 4, kind: input, shape index: {}]
  %s5 = inlined_call_operand.hbm [shape: f32[8,128], index: 5, kind: output, shape index: {}]
  %s6 = sld [smem:[#allocation0]]
  $region69: #{tpu_custom_call.1} parent=0
    _
  %s8 = ssub.s32 1, %s6
  %s9 = scalar_select 0, %s8, %s6
  $region1: #{tpu_custom_call.1} parent=0
    #allocation3 [shape = 'u8[8192]{0}', space=vmem, size = 0x2000, scoped, tag = 'input window, operand 0']
    #allocation4 [shape = 's32[2]{0}', space=sflag, size = 0x8, scoped, tag = 'scoped memory for tpu_custom_call.1']
    #allocation5 [shape = 's32[2]{0}', space=sflag, size = 0x8, scoped, tag = 'scoped memory for tpu_custom_call.1']
    #allocation6 [shape = 'u8[131072]{0}', space=vmem, size = 0x20000, scoped, tag = 'input window, operand 3']
    #allocation7 [shape = 's32[2]{0}', space=sflag, size = 0x8, scoped, tag = 'scoped memory for tpu_custom_call.1']
    #allocation8 [shape = 'u8[4096]{0}', space=vmem, size = 0x1000, scoped, tag = 'output window, operand 0, single buffered']
    %10 = vsyncpa [#allocation4], 0
    %s11 = scalar_lea.sflag [#allocation4], 1
    %12 = vsyncpa %s11, 0
    %13 = vsyncpa [#allocation7], 0
    %s14 = scalar_lea.sflag [#allocation7], 1
    %15 = vsyncpa %s14, 0
    %16 = vsyncpa [#allocation5], 0
    loop: start=0, step=1, limit=5
    $region2: #{tpu_custom_call.1} parent=1 // loop_pre_header
      _
    $region3: #{tpu_custom_call.1} parent=1 // loop_header
      %s18 = sphi 0, %s22
      %p19 = scmp.ge.s32.totalorder %s18, 5
      %s28 = sphi 0, %s30
      %s31 = sphi 0, %s28
      %s32 = sphi 0, %s31
      %s48 = sphi 0, %s32
      %s54 = sphi 0, %s56
      %s57 = sphi 0, %s54
      %s58 = sphi 0, %s57
      %s74 = sphi 0, %s58
      %s80 = sphi 0, %s82
      %s83 = sphi 0, %s80
      %s84 = sphi 0, %s83
      %s100 = sphi 0, %s84
      %s106 = sphi 0, %s108
      %s109 = sphi 0, %s106
      %s110 = sphi 0, %s109
      %s126 = sphi 0, %s110
      %s130 = sphi 0, %s130
      %s132 = sphi 0, %s130
      %s133 = sphi 0, %s132
      %s147 = sphi 0, %s133
      %s151 = sphi 0, %s151
      %s153 = sphi 0, %s151
      %s154 = sphi 0, %s153
      %s168 = sphi 0, %s154
    $region4: #{tpu_custom_call.1} parent=1 // loop_header_branch
      %21 = sbr.rel (%p19) target = $region8
    $region5: #{tpu_custom_call.1} parent=1 // loop_body
      %s23 = ssub.s32 %s18, 1
      %s24 = ssub.s32 %s18, 2
      %s25 = sadd.s32 %s18, 1
      %s26 = ssub.s32 %s18, %s25
      %p27 = scmp.eq.s32.totalorder %s26, 0
      %s29 = sadd.s32 %s28, 1
      %s30 = scalar_select %p27, %s28, %s29
      %p33 = pneg %p27
      %p34 = scmp.eq.s32.totalorder %s18, 2
      %p35 = por %p33, %p34
      %p36 = scmp.ne.s32.totalorder %s28, %s31
      %p37 = scmp.eq.s32.totalorder %s18, 0
      %p38 = por %p36, %p37
      %p39 = scmp.ne.s32.totalorder %s28, %s31
      %p40 = scmp.eq.s32.totalorder %s23, 2
      %p41 = por %p39, %p40
      %p42 = scmp.ne.s32.totalorder %s31, %s32
      %p43 = scmp.eq.s32.totalorder %s23, 0
      %p44 = por %p42, %p43
      %p45 = scmp.ne.s32.totalorder %s31, %s32
      %p46 = scmp.eq.s32.totalorder %s24, 2
      %p47 = por %p45, %p46
      %p49 = scmp.ne.s32.totalorder %s32, %s48
      %p50 = scmp.eq.s32.totalorder %s24, 0
      %p51 = por %p49, %p50
      %s52 = ssub.s32 %s18, %s25
      %p53 = scmp.eq.s32.totalorder %s52, 0
      %s55 = sadd.s32 %s54, 1
      %s56 = scalar_select %p53, %s54, %s55
      %p59 = pneg %p53
      %p60 = scmp.eq.s32.totalorder %s18, 2
      %p61 = por %p59, %p60
      %p62 = scmp.ne.s32.totalorder %s54, %s57
      %p63 = scmp.eq.s32.totalorder %s18, 0
      %p64 = por %p62, %p63
      %p65 = scmp.ne.s32.totalorder %s54, %s57
      %p66 = scmp.eq.s32.totalorder %s23, 2
      %p67 = por %p65, %p66
      %p68 = scmp.ne.s32.totalorder %s57, %s58
      %p69 = scmp.eq.s32.totalorder %s23, 0
      %p70 = por %p68, %p69
      %p71 = scmp.ne.s32.totalorder %s57, %s58
      %p72 = scmp.eq.s32.totalorder %s24, 2
      %p73 = por %p71, %p72
      %p75 = scmp.ne.s32.totalorder %s58, %s74
      %p76 = scmp.eq.s32.totalorder %s24, 0
      %p77 = por %p75, %p76
      %s78 = ssub.s32 %s18, %s25
      %p79 = scmp.eq.s32.totalorder %s78, 0
      %s81 = sadd.s32 %s80, 1
      %s82 = scalar_select %p79, %s80, %s81
      %p85 = pneg %p79
      %p86 = scmp.eq.s32.totalorder %s18, 2
      %p87 = por %p85, %p86
      %p88 = scmp.ne.s32.totalorder %s80, %s83
      %p89 = scmp.eq.s32.totalorder %s18, 0
      %p90 = por %p88, %p89
      %p91 = scmp.ne.s32.totalorder %s80, %s83
      %p92 = scmp.eq.s32.totalorder %s23, 2
      %p93 = por %p91, %p92
      %p94 = scmp.ne.s32.totalorder %s83, %s84
      %p95 = scmp.eq.s32.totalorder %s23, 0
      %p96 = por %p94, %p95
      %p97 = scmp.ne.s32.totalorder %s83, %s84
      %p98 = scmp.eq.s32.totalorder %s24, 2
      %p99 = por %p97, %p98
      %p101 = scmp.ne.s32.totalorder %s84, %s100
      %p102 = scmp.eq.s32.totalorder %s24, 0
      %p103 = por %p101, %p102
      %s104 = ssub.s32 %s18, %s25
      %p105 = scmp.eq.s32.totalorder %s104, 0
      %s107 = sadd.s32 %s106, 1
      %s108 = scalar_select %p105, %s106, %s107
      %p111 = pneg %p105
      %p112 = scmp.eq.s32.totalorder %s18, 2
      %p113 = por %p111, %p112
      %p114 = scmp.ne.s32.totalorder %s106, %s109
      %p115 = scmp.eq.s32.totalorder %s18, 0
      %p116 = por %p114, %p115
      %p117 = scmp.ne.s32.totalorder %s106, %s109
      %p118 = scmp.eq.s32.totalorder %s23, 2
      %p119 = por %p117, %p118
      %p120 = scmp.ne.s32.totalorder %s109, %s110
      %p121 = scmp.eq.s32.totalorder %s23, 0
      %p122 = por %p120, %p121
      %p123 = scmp.ne.s32.totalorder %s109, %s110
      %p124 = scmp.eq.s32.totalorder %s24, 2
      %p125 = por %p123, %p124
      %p127 = scmp.ne.s32.totalorder %s110, %s126
      %p128 = scmp.eq.s32.totalorder %s24, 0
      %p129 = por %p127, %p128
      %s131 = sadd.s32 %s130, 1
      %p134 = scmp.eq.s32.totalorder %s18, 2
      %p135 = scmp.ne.s32.totalorder %s130, %s132
      %p136 = scmp.eq.s32.totalorder %s18, 0
      %p137 = por %p135, %p136
      %p138 = scmp.ne.s32.totalorder %s130, %s132
      %p139 = scmp.eq.s32.totalorder %s23, 2
      %p140 = por %p138, %p139
      %p141 = scmp.ne.s32.totalorder %s132, %s133
      %p142 = scmp.eq.s32.totalorder %s23, 0
      %p143 = por %p141, %p142
      %p144 = scmp.ne.s32.totalorder %s132, %s133
      %p145 = scmp.eq.s32.totalorder %s24, 2
      %p146 = por %p144, %p145
      %p148 = scmp.ne.s32.totalorder %s133, %s147
      %p149 = scmp.eq.s32.totalorder %s24, 0
      %p150 = por %p148, %p149
      %s152 = sadd.s32 %s151, 1
      %p155 = scmp.eq.s32.totalorder %s18, 2
      %p156 = scmp.ne.s32.totalorder %s151, %s153
      %p157 = scmp.eq.s32.totalorder %s18, 0
      %p158 = por %p156, %p157
      %p159 = scmp.ne.s32.totalorder %s151, %s153
      %p160 = scmp.eq.s32.totalorder %s23, 2
      %p161 = por %p159, %p160
      %p162 = scmp.ne.s32.totalorder %s153, %s154
      %p163 = scmp.eq.s32.totalorder %s23, 0
      %p164 = por %p162, %p163
      %p165 = scmp.ne.s32.totalorder %s153, %s154
      %p166 = scmp.eq.s32.totalorder %s24, 2
      %p167 = por %p165, %p166
      %p169 = scmp.ne.s32.totalorder %s154, %s168
      %p170 = scmp.eq.s32.totalorder %s24, 0
      %p171 = por %p169, %p170
      %p172 = scmp.le.s32.totalorder 1, %s18
      %p173 = scmp.lt.s32.totalorder %s18, 4
      %p174 = pnand %p172, %p173
      %p175 = pneg %p174
      // Predicated region
      $region9: #{tpu_custom_call.1} parent=5 // pred_check
        _
      $region10: #{tpu_custom_call.1} parent=5 // pred_check_branch
        %177 = sbr.rel (%p174) target = $region12
      $region11: #{tpu_custom_call.1} parent=5 // pred_region
        %s178 = ssub.s32 %s18, 1
        // Predicated region
        $region13: #{tpu_custom_call.1} parent=11 // pred_check
          %p179 = pneg %p143
        $region14: #{tpu_custom_call.1} parent=11 // pred_check_branch
          %181 = sbr.rel (%p179) target = $region16
        $region15: #{tpu_custom_call.1} parent=11 // pred_region
          _
        $region16: #{tpu_custom_call.1} parent=11 // pred_fallthru
          _
      $region12: #{tpu_custom_call.1} parent=5 // pred_fallthru
        _
      %p182 = scmp.lt.s32.totalorder %s18, 3
      // Predicated region
      $region17: #{tpu_custom_call.1} parent=5 // pred_check
        %p183 = pneg %p182
      $region18: #{tpu_custom_call.1} parent=5 // pred_check_branch
        %185 = sbr.rel (%p183) target = $region20
      $region19: #{tpu_custom_call.1} parent=5 // pred_region
        // Predicated region
        $region21: #{tpu_custom_call.1} parent=19 // pred_check
          %p186 = pneg %p38
        $region22: #{tpu_custom_call.1} parent=19 // pred_check_branch
          %188 = sbr.rel (%p186) target = $region24
        $region23: #{tpu_custom_call.1} parent=19 // pred_region
          %s189 = sand.u32 %s28, 1
          %s190 = scalar_lea.sflag [#allocation4], %s189
          %s191 = sand.u32 %s28, 1
          %s192 = smul.addr %s191, 8
          %s193 = scalar_lea.vmem [#allocation3], %s192
          %s195 = ssub.s32 128, 128
          %196 = vsyncadd %s190, %s195
          %s197 = smul.addr %s18, 128
          %s198 = scalar_lea.hbm %s0, %s197
          %s200 = sshll.u32 %s193, 4
          %s201 = int_to_ptr.vmem [resolvable:$true] %s200
          %203 = dma.hbm_to_vmem [thread:$0]  %s198, 128, %s201, %s190
        $region24: #{tpu_custom_call.1} parent=19 // pred_fallthru
          _
        // Predicated region
        $region25: #{tpu_custom_call.1} parent=19 // pred_check
          %p204 = pneg %p64
        $region26: #{tpu_custom_call.1} parent=19 // pred_check_branch
          %206 = sbr.rel (%p204) target = $region28
        $region27: #{tpu_custom_call.1} parent=19 // pred_region
          %p207 = scmp.lt.s32.totalorder %s18, 2
          %s208 = scalar_select %p207, %s18, 2
          %s209 = scalar_lea.vmem %s1, %s208
        $region28: #{tpu_custom_call.1} parent=19 // pred_fallthru
          _
        // Predicated region
        $region29: #{tpu_custom_call.1} parent=19 // pred_check
          %p210 = pneg %p90
        $region30: #{tpu_custom_call.1} parent=19 // pred_check_branch
          %212 = sbr.rel (%p210) target = $region32
        $region31: #{tpu_custom_call.1} parent=19 // pred_region
          %p213 = scmp.lt.s32.totalorder %s18, 2
          %s214 = scalar_select %p213, %s18, 2
          %s215 = scalar_lea.vmem %s2, %s214
        $region32: #{tpu_custom_call.1} parent=19 // pred_fallthru
          _
        // Predicated region
        $region33: #{tpu_custom_call.1} parent=19 // pred_check
          %p216 = pneg %p116
        $region34: #{tpu_custom_call.1} parent=19 // pred_check_branch
          %218 = sbr.rel (%p216) target = $region36
        $region35: #{tpu_custom_call.1} parent=19 // pred_region
          %s219 = sand.u32 %s106, 1
          %s220 = scalar_lea.sflag [#allocation7], %s219
          %s221 = sand.u32 %s106, 1
          %s222 = smul.addr %s221, 128
          %s223 = scalar_lea.vmem [#allocation6], %s222
          %s224 = smul.u32 16, %s18
          %s226 = ssub.s32 2048, 2048
          %227 = vsyncadd %s220, %s226
          %s228 = smul.addr %s224, 128
          %s229 = scalar_lea.hbm %s3, %s228
          %s230 = sshll.u32 %s223, 4
          %s231 = int_to_ptr.vmem [resolvable:$true] %s230
          %236 = dma.hbm_to_vmem [thread:$0]  %s229, 2048, %s231, %s220, 128, 128, 8
        $region36: #{tpu_custom_call.1} parent=19 // pred_fallthru
          _
      $region20: #{tpu_custom_call.1} parent=5 // pred_fallthru
        _
      %p237 = scmp.le.s32.totalorder 1, %s18
      %p238 = scmp.lt.s32.totalorder %s18, 4
      %p239 = pnand %p237, %p238
      %p240 = pneg %p239
      // Predicated region
      $region37: #{tpu_custom_call.1} parent=5 // pred_check
        _
      $region38: #{tpu_custom_call.1} parent=5 // pred_check_branch
        %242 = sbr.rel (%p239) target = $region40
      $region39: #{tpu_custom_call.1} parent=5 // pred_region
        %s243 = ssub.s32 %s18, 1
        %s244 = sand.u32 %s31, 1
        %s245 = scalar_lea.sflag [#allocation4], %s244
        %s246 = sand.u32 %s31, 1
        %s247 = smul.addr %s246, 8
        %s248 = scalar_lea.vmem [#allocation3], %s247
        // Predicated region
        $region41: #{tpu_custom_call.1} parent=39 // pred_check
          %p249 = pneg %p44
        $region42: #{tpu_custom_call.1} parent=39 // pred_check_branch
          %251 = sbr.rel (%p249) target = $region44
        $region43: #{tpu_custom_call.1} parent=39 // pred_region
          %252 = dma.done %s245, 128
        $region44: #{tpu_custom_call.1} parent=39 // pred_fallthru
          _
        %s253 = sand.u32 %s109, 1
        %s254 = scalar_lea.sflag [#allocation7], %s253
        %s255 = sand.u32 %s109, 1
        %s256 = smul.addr %s255, 128
        %s257 = scalar_lea.vmem [#allocation6], %s256
        // Predicated region
        $region45: #{tpu_custom_call.1} parent=39 // pred_check
          %p258 = pneg %p122
        $region46: #{tpu_custom_call.1} parent=39 // pred_check_branch
          %260 = sbr.rel (%p258) target = $region48
        $region47: #{tpu_custom_call.1} parent=39 // pred_region
          %261 = dma.done %s254, 2048
        $region48: #{tpu_custom_call.1} parent=39 // pred_fallthru
          _
        %s262 = sand.u32 %s31, 1
        %s263 = scalar_lea.sflag [#allocation4], %s262
        %s264 = sand.u32 %s31, 1
        %s265 = smul.addr %s264, 8
        %s266 = scalar_lea.vmem [#allocation3], %s265
        %p267 = pneg %p44
        %p268 = pneg %p41
        %p269 = scmp.lt.s32.totalorder %s23, 2
        %s270 = scalar_select %p269, %s23, 2
        %s271 = scalar_lea.vmem %s1, %s270
        %p272 = pneg %p70
        %p273 = pneg %p67
        %p274 = scmp.lt.s32.totalorder %s23, 2
        %s275 = scalar_select %p274, %s23, 2
        %s276 = scalar_lea.vmem %s2, %s275
        %p277 = pneg %p96
        %p278 = pneg %p93
        %s279 = sand.u32 %s109, 1
        %s280 = scalar_lea.sflag [#allocation7], %s279
        %s281 = sand.u32 %s109, 1
        %s282 = smul.addr %s281, 128
        %s283 = scalar_lea.vmem [#allocation6], %s282
        %p284 = pneg %p122
        %p285 = pneg %p119
        %p286 = pneg %p143
        %p287 = pneg %p140
        %p288 = pneg %p164
        %p289 = pneg %p161
        %p290 = scmp.lt.s32.totalorder %s23, 2
        %s291 = scalar_select %p290, %s23, 2
        %s292 = scalar_lea.vmem %s1, %s291
        %p293 = scmp.lt.s32.totalorder %s23, 2
        %s294 = scalar_select %p293, %s23, 2
        %s295 = scalar_lea.vmem %s2, %s294
        %s296 = smul.u32 16, %s23
        %p297 = scmp.eq.s32.totalorder %s23, 0
        // Predicated region
        $region49: #{tpu_custom_call.1} parent=39 // pred_check
          %p298 = pneg %p297
        $region50: #{tpu_custom_call.1} parent=39 // pred_check_branch
          %300 = sbr.rel (%p298) target = $region52
        $region51: #{tpu_custom_call.1} parent=39 // pred_region
          %301 = vst [vmem:[#allocation2] sm:$0xff] 0.0
        $region52: #{tpu_custom_call.1} parent=39 // pred_fallthru
          _
        %v302 = vld [vmem:[%s248] sm:$0xff]
        %v303 = vrot.slane %v302, 4
        %v304 = vadd.f32 %v302, %v303
        %v305 = vrot.slane %v304, 2
        %v306 = vadd.f32 %v304, %v305
        %v307 = vrot.slane %v306, 1
        %v308 = vadd.f32 %v306, %v307
        %v309 = vmul.f32 %v308, 0.125
        %v310 = vmul.f32 %v302, %v302
        %v311 = vrot.slane %v310, 4
        %v312 = vadd.f32 %v310, %v311
        %v313 = vrot.slane %v312, 2
        %v314 = vadd.f32 %v312, %v313
        %v315 = vrot.slane %v314, 1
        %v316 = vadd.f32 %v314, %v315
        %v317 = vmul.f32 %v316, 0.125
        %v318 = vmul.f32 %v309, %v309
        %v319 = vsub.f32 %v317, %v318
        %v320 = vld [vmem:[%s292] sm:$0x1]
        %v321 = vadd.f32 %v319, 1e-05
        %v322 = vrsqrt.pop %v321
        %v323 = vmul.f32 %v320, %v322
        %v324 = vld [vmem:[%s257] sm:$0xff]
        %v325 = vld [vmem:[%s257 + $0x8] sm:$0xff]
        %v326 = vld [vmem:[%s257 + $0x10] sm:$0xff]
        %v327 = vld [vmem:[%s257 + $0x18] sm:$0xff]
        %v328 = vld [vmem:[%s257 + $0x20] sm:$0xff]
        %v329 = vld [vmem:[%s257 + $0x28] sm:$0xff]
        %v330 = vld [vmem:[%s257 + $0x30] sm:$0xff]
        %v331 = vld [vmem:[%s257 + $0x38] sm:$0xff]
        %v332 = vld [vmem:[%s257 + $0x40] sm:$0xff]
        %v333 = vld [vmem:[%s257 + $0x48] sm:$0xff]
        %v334 = vld [vmem:[%s257 + $0x50] sm:$0xff]
        %v335 = vld [vmem:[%s257 + $0x58] sm:$0xff]
        %v336 = vld [vmem:[%s257 + $0x60] sm:$0xff]
        %v337 = vld [vmem:[%s257 + $0x68] sm:$0xff]
        %v338 = vld [vmem:[%s257 + $0x70] sm:$0xff]
        %v339 = vld [vmem:[%s257 + $0x78] sm:$0xff]
        %340 = vxpose.xlu0.b32.start [1/16] %v323, 128
        %341 = vxpose.xlu0.b32.cont [2/16] 0.0, 128
        %342 = vxpose.xlu0.b32.cont [3/16] 0.0, 128
        %343 = vxpose.xlu0.b32.cont [4/16] 0.0, 128
        %344 = vxpose.xlu0.b32.cont [5/16] 0.0, 128
        %345 = vxpose.xlu0.b32.cont [6/16] 0.0, 128
        %346 = vxpose.xlu0.b32.cont [7/16] 0.0, 128
        %347 = vxpose.xlu0.b32.cont [8/16] 0.0, 128
        %348 = vxpose.xlu0.b32.cont [9/16] 0.0, 128
        %349 = vxpose.xlu0.b32.cont [10/16] 0.0, 128
        %350 = vxpose.xlu0.b32.cont [11/16] 0.0, 128
        %351 = vxpose.xlu0.b32.cont [12/16] 0.0, 128
        %352 = vxpose.xlu0.b32.cont [13/16] 0.0, 128
        %353 = vxpose.xlu0.b32.cont [14/16] 0.0, 128
        %354 = vxpose.xlu0.b32.cont [15/16] 0.0, 128
        %355 = vxpose.xlu0.b32.end [16/16] 0.0, 128
        %v356 = vpop.trf.xlu0
        %v357 = vpop.trf.xlu0
        %v358 = vpop.trf.xlu0
        %v359 = vpop.trf.xlu0
        %v360 = vpop.trf.xlu0
        %v361 = vpop.trf.xlu0
        %v362 = vpop.trf.xlu0
        %v363 = vpop.trf.xlu0
        %v364 = vpop.trf.xlu0
        %v365 = vpop.trf.xlu0
        %v366 = vpop.trf.xlu0
        %v367 = vpop.trf.xlu0
        %v368 = vpop.trf.xlu0
        %v369 = vpop.trf.xlu0
        %v370 = vpop.trf.xlu0
        %v371 = vpop.trf.xlu0
        %373 = vset.pattern.permute.xlu0 0
        %374 = vperm.xlu0 %373, %v356
        %v375 = vpop.permute.xlu0 %374
        %378 = vset.pattern.permute.xlu0 0
        %379 = vperm.xlu0 %378, %v357
        %v380 = vpop.permute.xlu0 %379
        %383 = vset.pattern.permute.xlu0 0
        %384 = vperm.xlu0 %383, %v358
        %v385 = vpop.permute.xlu0 %384
        %388 = vset.pattern.permute.xlu0 0
        %389 = vperm.xlu0 %388, %v359
        %v390 = vpop.permute.xlu0 %389
        %393 = vset.pattern.permute.xlu0 0
        %394 = vperm.xlu0 %393, %v360
        %v395 = vpop.permute.xlu0 %394
        %398 = vset.pattern.permute.xlu0 0
        %399 = vperm.xlu0 %398, %v361
        %v400 = vpop.permute.xlu0 %399
        %403 = vset.pattern.permute.xlu0 0
        %404 = vperm.xlu0 %403, %v362
        %v405 = vpop.permute.xlu0 %404
        %408 = vset.pattern.permute.xlu0 0
        %409 = vperm.xlu0 %408, %v363
        %v410 = vpop.permute.xlu0 %409
        %413 = vset.pattern.permute.xlu0 0
        %414 = vperm.xlu0 %413, %v364
        %v415 = vpop.permute.xlu0 %414
        %418 = vset.pattern.permute.xlu0 0
        %419 = vperm.xlu0 %418, %v365
        %v420 = vpop.permute.xlu0 %419
        %423 = vset.pattern.permute.xlu0 0
        %424 = vperm.xlu0 %423, %v366
        %v425 = vpop.permute.xlu0 %424
        %428 = vset.pattern.permute.xlu0 0
        %429 = vperm.xlu0 %428, %v367
        %v430 = vpop.permute.xlu0 %429
        %433 = vset.pattern.permute.xlu0 0
        %434 = vperm.xlu0 %433, %v368
        %v435 = vpop.permute.xlu0 %434
        %438 = vset.pattern.permute.xlu0 0
        %439 = vperm.xlu0 %438, %v369
        %v440 = vpop.permute.xlu0 %439
        %443 = vset.pattern.permute.xlu0 0
        %444 = vperm.xlu0 %443, %v370
        %v445 = vpop.permute.xlu0 %444
        %448 = vset.pattern.permute.xlu0 0
        %449 = vperm.xlu0 %448, %v371
        %v450 = vpop.permute.xlu0 %449
        %v452 = vmul.f32 %v324, %v375
        %v453 = vmul.f32 %v325, %v380
        %v454 = vmul.f32 %v326, %v385
        %v455 = vmul.f32 %v327, %v390
        %v456 = vmul.f32 %v328, %v395
        %v457 = vmul.f32 %v329, %v400
        %v458 = vmul.f32 %v330, %v405
        %v459 = vmul.f32 %v331, %v410
        %v460 = vmul.f32 %v332, %v415
        %v461 = vmul.f32 %v333, %v420
        %v462 = vmul.f32 %v334, %v425
        %v463 = vmul.f32 %v335, %v430
        %v464 = vmul.f32 %v336, %v435
        %v465 = vmul.f32 %v337, %v440
        %v466 = vmul.f32 %v338, %v445
        %v467 = vmul.f32 %v339, %v450
        %v468 = vld [vmem:[%s295] sm:$0x1]
        %v469 = vmul.f32 %v309, %v323
        %v470 = vsub.f32 %v468, %v469
        %v471 = vld [vmem:[#allocation2] sm:$0xff]
        %472 = vmatprep.subr.mxu0 0.0
        %473 = vmatpush1.msra.mxu0 %v324
        %474 = vmatprep.subr.mxu0 0.0
        %475 = vmatpush1.msra.mxu0 %v325
        %476 = vmatprep.subr.mxu0 0.0
        %477 = vmatpush1.msra.mxu0 %v326
        %478 = vmatprep.subr.mxu0 0.0
        %479 = vmatpush1.msra.mxu0 %v327
        %480 = vmatprep.subr.mxu0 0.0
        %481 = vmatpush1.msra.mxu0 %v328
        %482 = vmatprep.subr.mxu0 0.0
        %483 = vmatpush1.msra.mxu0 %v329
        %484 = vmatprep.subr.mxu0 0.0
        %485 = vmatpush1.msra.mxu0 %v330
        %486 = vmatprep.subr.mxu0 0.0
        %487 = vmatpush1.msra.mxu0 %v331
        %488 = vmatprep.subr.mxu0 0.0
        %489 = vmatpush1.msra.mxu0 %v332
        %490 = vmatprep.subr.mxu0 0.0
        %491 = vmatpush1.msra.mxu0 %v333
        %492 = vmatprep.subr.mxu0 0.0
        %493 = vmatpush1.msra.mxu0 %v334
        %494 = vmatprep.subr.mxu0 0.0
        %495 = vmatpush1.msra.mxu0 %v335
        %496 = vmatprep.subr.mxu0 0.0
        %497 = vmatpush1.msra.mxu0 %v336
        %498 = vmatprep.subr.mxu0 0.0
        %499 = vmatpush1.msra.mxu0 %v337
        %500 = vmatprep.subr.mxu0 0.0
        %501 = vmatpush1.msra.mxu0 %v338
        %502 = vmatprep.subr.mxu0 0.0
        %503 = vmatpush1.msra.mxu0 %v339
        %504 = vmatprep.subr.mxu0 0.0
        %505 = vmatpush1.msra.mxu0 0.0
        %506 = vmatprep.subr.mxu0 0.0
        %507 = vmatpush1.msra.mxu0 0.0
        %508 = vmatprep.subr.mxu0 0.0
        %509 = vmatpush1.msra.mxu0 0.0
        %510 = vmatprep.subr.mxu0 0.0
        %511 = vmatpush1.msra.mxu0 0.0
        %512 = vmatprep.subr.mxu0 0.0
        %513 = vmatpush1.msra.mxu0 0.0
        %514 = vmatprep.subr.mxu0 0.0
        %515 = vmatpush1.msra.mxu0 0.0
        %516 = vmatprep.subr.mxu0 0.0
        %517 = vmatpush1.msra.mxu0 0.0
        %518 = vmatprep.subr.mxu0 0.0
        %519 = vmatpush1.msra.mxu0 0.0
        %520 = vmatprep.subr.mxu0 0.0
        %521 = vmatpush1.msra.mxu0 0.0
        %522 = vmatprep.subr.mxu0 0.0
        %523 = vmatpush1.msra.mxu0 0.0
        %524 = vmatprep.subr.mxu0 0.0
        %525 = vmatpush1.msra.mxu0 0.0
        %526 = vmatprep.subr.mxu0 0.0
        %527 = vmatpush1.msra.mxu0 0.0
        %528 = vmatprep.subr.mxu0 0.0
        %529 = vmatpush1.msra.mxu0 0.0
        %530 = vmatprep.subr.mxu0 0.0
        %531 = vmatpush1.msra.mxu0 0.0
        %532 = vmatprep.subr.mxu0 0.0
        %533 = vmatpush1.msra.mxu0 0.0
        %534 = vmatprep.subr.mxu0 0.0
        %535 = vmatpush1.msra.mxu0 0.0
        %536 = vmatprep.mubr.f32.mxu0 0.0
        %537 = vmatmul.mubr.f32.gmra.mrb[0].mxu0 %v470
        %v538 = vpop.f32.mrb[0].mxu0
        %v539 = vadd.f32 0.0, %v538
        %v540 = vpop.f32.mrb[0].mxu0
        %541 = vdwg.mxu0
        %v542 = vlaneseq
        %v543 = vshrl.u32 %v542, 7
        %v544 = vsub.s32 0, %v543
        %v545 = vrot.slane %v539, %v544
        %546 = vmatprep.subr.mxu0 0.0
        %547 = vmatpush1.msra.mxu0 %v452
        %548 = vmatprep.subr.mxu0 0.0
        %549 = vmatpush1.msra.mxu0 %v453
        %550 = vmatprep.subr.mxu0 0.0
        %551 = vmatpush1.msra.mxu0 %v454
        %552 = vmatprep.subr.mxu0 0.0
        %553 = vmatpush1.msra.mxu0 %v455
        %554 = vmatprep.subr.mxu0 0.0
        %555 = vmatpush1.msra.mxu0 %v456
        %556 = vmatprep.subr.mxu0 0.0
        %557 = vmatpush1.msra.mxu0 %v457
        %558 = vmatprep.subr.mxu0 0.0
        %559 = vmatpush1.msra.mxu0 %v458
        %560 = vmatprep.subr.mxu0 0.0
        %561 = vmatpush1.msra.mxu0 %v459
        %562 = vmatprep.subr.mxu0 0.0
        %563 = vmatpush1.msra.mxu0 %v460
        %564 = vmatprep.subr.mxu0 0.0
        %565 = vmatpush1.msra.mxu0 %v461
        %566 = vmatprep.subr.mxu0 0.0
        %567 = vmatpush1.msra.mxu0 %v462
        %568 = vmatprep.subr.mxu0 0.0
        %569 = vmatpush1.msra.mxu0 %v463
        %570 = vmatprep.subr.mxu0 0.0
        %571 = vmatpush1.msra.mxu0 %v464
        %572 = vmatprep.subr.mxu0 0.0
        %573 = vmatpush1.msra.mxu0 %v465
        %574 = vmatprep.subr.mxu0 0.0
        %575 = vmatpush1.msra.mxu0 %v466
        %576 = vmatprep.subr.mxu0 0.0
        %577 = vmatpush1.msra.mxu0 %v467
        %578 = vmatprep.subr.mxu0 0.0
        %579 = vmatpush1.msra.mxu0 0.0
        %580 = vmatprep.subr.mxu0 0.0
        %581 = vmatpush1.msra.mxu0 0.0
        %582 = vmatprep.subr.mxu0 0.0
        %583 = vmatpush1.msra.mxu0 0.0
        %584 = vmatprep.subr.mxu0 0.0
        %585 = vmatpush1.msra.mxu0 0.0
        %586 = vmatprep.subr.mxu0 0.0
        %587 = vmatpush1.msra.mxu0 0.0
        %588 = vmatprep.subr.mxu0 0.0
        %589 = vmatpush1.msra.mxu0 0.0
        %590 = vmatprep.subr.mxu0 0.0
        %591 = vmatpush1.msra.mxu0 0.0
        %592 = vmatprep.subr.mxu0 0.0
        %593 = vmatpush1.msra.mxu0 0.0
        %594 = vmatprep.subr.mxu0 0.0
        %595 = vmatpush1.msra.mxu0 0.0
        %596 = vmatprep.subr.mxu0 0.0
        %597 = vmatpush1.msra.mxu0 0.0
        %598 = vmatprep.subr.mxu0 0.0
        %599 = vmatpush1.msra.mxu0 0.0
        %600 = vmatprep.subr.mxu0 0.0
        %601 = vmatpush1.msra.mxu0 0.0
        %602 = vmatprep.subr.mxu0 0.0
        %603 = vmatpush1.msra.mxu0 0.0
        %604 = vmatprep.subr.mxu0 0.0
        %605 = vmatpush1.msra.mxu0 0.0
        %606 = vmatprep.subr.mxu0 0.0
        %607 = vmatpush1.msra.mxu0 0.0
        %608 = vmatprep.subr.mxu0 0.0
        %609 = vmatpush1.msra.mxu0 0.0
        %610 = vmatprep.mubr.f32.mxu0 0.0
        %611 = vmatmul.mubr.f32.gmra.mrb[0].mxu0 %v302
        %v612 = vpop.f32.mrb[0].mxu0
        %v613 = vadd.f32 %v545, %v612
        %v614 = vpop.f32.mrb[0].mxu0
        %615 = vdwg.mxu0
        %v616 = vadd.f32 %v471, %v613
        %617 = vst [vmem:[#allocation2] sm:$0xff] %v616
        %p618 = scmp.eq.s32.totalorder %s23, 2
        // Predicated region
        $region53: #{tpu_custom_call.1} parent=39 // pred_check
          %p619 = pneg %p618
        $region54: #{tpu_custom_call.1} parent=39 // pred_check_branch
          %621 = sbr.rel (%p619) target = $region56
        $region55: #{tpu_custom_call.1} parent=39 // pred_region
          %v622 = vld [vmem:[#allocation2] sm:$0xff]
          %v623 = vld [vmem:[%s4] sm:$0x1]
          %v625 = vlaneseq
          %v626 = vshrl.u32 %v625, 7
          %v627 = vsub.s32 0, %v626
          %v628 = vrot.slane %v623, %v627
          %v630 = vadd.f32 %v622, %v628
          %631 = vst [vmem:[#allocation8] sm:$0xff] %v630
        $region56: #{tpu_custom_call.1} parent=39 // pred_fallthru
          _
        // Predicated region
        $region57: #{tpu_custom_call.1} parent=39 // pred_check
          %p632 = pneg %p161
        $region58: #{tpu_custom_call.1} parent=39 // pred_check_branch
          %634 = sbr.rel (%p632) target = $region60
        $region59: #{tpu_custom_call.1} parent=39 // pred_region
          %s636 = ssub.s32 128, 128
          %637 = vsyncadd [#allocation5], %s636
          %s639 = sshll.u32 [#allocation8], 4
          %s640 = int_to_ptr.vmem [resolvable:$true] %s639
          %642 = dma.vmem_to_hbm [thread:$0]  %s640, 128, %s5, [#allocation5]
        $region60: #{tpu_custom_call.1} parent=39 // pred_fallthru
          _
        // Predicated region
        $region61: #{tpu_custom_call.1} parent=39 // pred_check
          %p643 = pneg %p161
        $region62: #{tpu_custom_call.1} parent=39 // pred_check_branch
          %645 = sbr.rel (%p643) target = $region64
        $region63: #{tpu_custom_call.1} parent=39 // pred_region
          %646 = dma.done [#allocation5], 128
        $region64: #{tpu_custom_call.1} parent=39 // pred_fallthru
          _
      $region40: #{tpu_custom_call.1} parent=5 // pred_fallthru
        _
      %p647 = scmp.le.s32.totalorder 2, %s18
      // Predicated region
      $region65: #{tpu_custom_call.1} parent=5 // pred_check
        %p648 = pneg %p647
      $region66: #{tpu_custom_call.1} parent=5 // pred_check_branch
        %650 = sbr.rel (%p648) target = $region68
      $region67: #{tpu_custom_call.1} parent=5 // pred_region
        %s651 = ssub.s32 %s18, 2
      $region68: #{tpu_custom_call.1} parent=5 // pred_fallthru
        _
    $region6: #{tpu_custom_call.1} parent=1 // loop_footer
      %s22 = sadd.s32 1, %s18
    $region7: #{tpu_custom_call.1} parent=1 // loop_footer_branch
      %17 = sbr.rel target = $region3
    $region8: #{tpu_custom_call.1} parent=1 // loop_exit
      _
    %652 = vsyncpa [#allocation4], 1
    %s653 = scalar_lea.sflag [#allocation4], 1
    %654 = vsyncpa %s653, 1
    %655 = vsyncpa [#allocation7], 1
    %s656 = scalar_lea.sflag [#allocation7], 1
    %657 = vsyncpa %s656, 1
    %658 = vsyncpa [#allocation5], 1
    %s659 = scalar_lea.sflag [#allocation5], 1
    %660 = vsyncpa %s659, 1

</llo_original>
